<compile_context>
chip_gen: v5e
topology: v5e:2x2
jax: 0.10.0
libtpu: 0.0.40
codegen_flags: <defaults>
</compile_context>

<pallas_src>
import jax
import jax.numpy as jnp
from jax.experimental import pallas as pl
from jax.experimental.pallas import tpu as pltpu


def _round_up(x, m):
    return ((x + m - 1) // m) * m


def _obs_model_kernel(x_ref, w1_ref, b1_ref, w2_ref, b2_ref, w3_ref, b3_ref,
                      out_ref):
    """One batch tile: relu(x@w1+b1) -> relu(.@w2+b2) -> .@w3+b3."""
    cdt = w1_ref.dtype  # MXU operand dtype (f32 or bf16); accumulation stays f32.

    # fc1 (single dot: concat already fused into x / stacked w1) + relu.
    h = jnp.dot(x_ref[...].astype(cdt), w1_ref[...],
                preferred_element_type=jnp.float32)
    h = jnp.maximum(h + b1_ref[...], 0.0)

    # fc2 + relu (bias add / relu in f32, dot operands in compute dtype).
    h = jnp.dot(h.astype(cdt), w2_ref[...],
                preferred_element_type=jnp.float32)
    h = jnp.maximum(h + b2_ref[...], 0.0)

    # fc3 (no activation).
    o = jnp.dot(h.astype(cdt), w3_ref[...],
                preferred_element_type=jnp.float32) + b3_ref[...]
    out_ref[...] = o.astype(out_ref.dtype)


def symbolic_observation_model(belief, state, params, *, tile_b=1024,
                               weight_dtype=jnp.float32):
    """Pallas wrapper.

    belief: [B, belief_size]   state: [B, state_size]
    params: w1 [belief+state, emb], b1 [1, emb], w2 [emb, emb], b2 [1, emb],
            w3 [emb, obs],          b3 [1, obs]
    returns: [B, obs] float32

    weight_dtype=jnp.bfloat16 enables the bf16 x bf16 MXU path (activations are
    cast too); f32 default keeps bit-exactness with the reference.
    """
    B, belief_size = belief.shape
    _, state_size = state.shape
    feat = belief_size + state_size
    emb = params["w2"].shape[1]
    obs = params["w3"].shape[1]
    f32 = jnp.float32
    act_dtype = jnp.dtype(weight_dtype)

    # ---- batch tiling: rows are the only padding (to a multiple of 8). --------
    B8 = _round_up(B, 8)
    tile_req = _round_up(max(8, min(tile_b, B8)), 8)     # multiple of 8 after clamp
    n_tiles = int(pl.cdiv(B8, tile_req))
    if B8 >= 1024:                 # v7x: both TensorCores need >= 2 grid steps.
        n_tiles = max(n_tiles, 2)
    tile_b = _round_up(int(pl.cdiv(B8, n_tiles)), 8)     # even out the tiles
    B_p = n_tiles * tile_b

    # ---- fuse concat (+ row padding) into one activation array; no lane pad. --
    if B_p == B:
        x = jnp.concatenate([belief, state], axis=1).astype(act_dtype)
    else:
        x = jnp.zeros((B_p, feat), act_dtype)
        x = x.at[:B, :belief_size].set(belief.astype(act_dtype))
        x = x.at[:B, belief_size:].set(state.astype(act_dtype))

    # ---- weights: tiny + VMEM-resident; just cast (w1 already stacked). -------
    w1 = params["w1"].astype(weight_dtype)   # [feat, emb]
    w2 = params["w2"].astype(weight_dtype)   # [emb, emb]
    w3 = params["w3"].astype(weight_dtype)   # [emb, obs]
    b1 = params["b1"].astype(f32)            # biases stay f32 (added to f32 acc)
    b2 = params["b2"].astype(f32)
    b3 = params["b3"].astype(f32)

    # Activations/outputs stream over the batch grid; weights/biases resident.
    act_spec = lambda nfeat: pl.BlockSpec((tile_b, nfeat), lambda i: (i, 0))
    resident = lambda a: pl.BlockSpec(a.shape, lambda i: (0, 0))

    flops = 2 * B_p * (feat * emb + emb * emb + emb * obs)
    bytes_accessed = int(
        x.size * x.dtype.itemsize
        + sum(a.size * a.dtype.itemsize for a in (w1, b1, w2, b2, w3, b3))
        + B_p * obs * 4)

    out_p = pl.pallas_call(
        _obs_model_kernel,
        out_shape=jax.ShapeDtypeStruct((B_p, obs), f32),
        grid=(n_tiles,),
        in_specs=[
            act_spec(feat),
            resident(w1), resident(b1),
            resident(w2), resident(b2),
            resident(w3), resident(b3),
        ],
        out_specs=pl.BlockSpec((tile_b, obs), lambda i: (i, 0)),
        compiler_params=pltpu.CompilerParams(
            dimension_semantics=("parallel",),      # v7x: shard batch over 2 TCs
            vmem_limit_bytes=32 * 1024 * 1024,      # safe on v5e/v6e/v7x
        ),
        cost_estimate=pl.CostEstimate(
            flops=flops, transcendentals=0, bytes_accessed=bytes_accessed),
    )(x, w1, b1, w2, b2, w3, b3)

    return out_p if B_p == B else out_p[:B]


def init_params(key, belief_size, state_size, embedding_size, observation_size):
    """Deterministic init matching nn.Linear shapes (weights pre-transposed,
    fc1 weight stored stacked as [belief+state, emb])."""
    k1, k2, k3, k4, k5, k6 = jax.random.split(key, 6)
    in1 = belief_size + state_size

    def lin(kw, kb, fan_in, fan_out):
        bound = 1.0 / jnp.sqrt(fan_in)
        w = jax.random.uniform(kw, (fan_in, fan_out), jnp.float32, -bound, bound)
        b = jax.random.uniform(kb, (1, fan_out), jnp.float32, -bound, bound)
        return w, b

    w1, b1 = lin(k1, k2, in1, embedding_size)
    w2, b2 = lin(k3, k4, embedding_size, embedding_size)
    w3, b3 = lin(k5, k6, embedding_size, observation_size)
    return {"w1": w1, "b1": b1, "w2": w2, "b2": b2, "w3": w3, "b3": b3}


def _reference(belief, state, p):
    x = jnp.concatenate([belief, state], axis=1)
    h = jnp.maximum(x @ p["w1"] + p["b1"], 0.0)
    h = jnp.maximum(h @ p["w2"] + p["b2"], 0.0)
    return h @ p["w3"] + p["b3"]


if __name__ == "__main__":
    belief_size = 32
    state_size = 32
    embedding_size = 64
    observation_size = 16

    key = jax.random.PRNGKey(0)
    kb, ks, kp, kb2, ks2 = jax.random.split(key, 5)
    params = init_params(kp, belief_size, state_size, embedding_size,
                         observation_size)

    # Small case (single batch tile, B multiple of 8).
    batch = 8
    belief = jax.random.normal(kb, (batch, belief_size), jnp.float32)
    state = jax.random.normal(ks, (batch, state_size), jnp.float32)
    out = jax.block_until_ready(symbolic_observation_model(belief, state, params))
    ref = _reference(belief, state, params)
    assert out.shape == (batch, observation_size)
    assert jnp.allclose(out, ref, atol=1e-4, rtol=1e-4)

    # Larger, non-multiple-of-8 batch with a multi-tile grid (exercises the
    # row-padding path and the batch-parallel grid: 3 tiles of 104 rows).
    batch2 = 300
    belief2 = jax.random.normal(kb2, (batch2, belief_size), jnp.float32)
    state2 = jax.random.normal(ks2, (batch2, state_size), jnp.float32)
    out2 = jax.block_until_ready(
        symbolic_observation_model(belief2, state2, params, tile_b=128))
    ref2 = _reference(belief2, state2, params)
    assert out2.shape == (batch2, observation_size)
    assert jnp.allclose(out2, ref2, atol=1e-4, rtol=1e-4)

    # bf16 compute path (true bf16 x bf16 dots, f32 accumulation) -- looser tol.
    out3 = jax.block_until_ready(
        symbolic_observation_model(belief2, state2, params,
                                   weight_dtype=jnp.bfloat16))
    assert out3.shape == (batch2, observation_size)
    assert jnp.allclose(out3, ref2, atol=5e-2, rtol=5e-2)

    print("KERNEL_OK")
</pallas_src>

<mosaic_0001>
module attributes {stable_mosaic.version = 11 : i64} {
  func.func @_obs_model_kernel(%arg0: i32, %arg1: memref<8x64xf32, #tpu.memory_space<vmem>>, %arg2: memref<64x64xf32, #tpu.memory_space<vmem>>, %arg3: memref<1x64xf32, #tpu.memory_space<vmem>>, %arg4: memref<64x64xf32, #tpu.memory_space<vmem>>, %arg5: memref<1x64xf32, #tpu.memory_space<vmem>>, %arg6: memref<64x16xf32, #tpu.memory_space<vmem>>, %arg7: memref<1x16xf32, #tpu.memory_space<vmem>>, %arg8: memref<8x16xf32, #tpu.memory_space<vmem>>) attributes {dimension_semantics = [#tpu.dimension_semantics<parallel>], iteration_bounds = array<i64: 1>, scalar_prefetch = 0 : i64, scratch_operands = 0 : i64, tpu.core_type = #tpu.core_type<tc>, window_params = [{transform_indices = @transform_0, window_bounds = array<i64: 8, 64>}, {pipeline_mode = #tpu.pipeline_mode<synchronous>, transform_indices = @transform_1, window_bounds = array<i64: 64, 64>}, {pipeline_mode = #tpu.pipeline_mode<synchronous>, transform_indices = @transform_2, window_bounds = array<i64: 1, 64>}, {pipeline_mode = #tpu.pipeline_mode<synchronous>, transform_indices = @transform_3, window_bounds = array<i64: 64, 64>}, {pipeline_mode = #tpu.pipeline_mode<synchronous>, transform_indices = @transform_4, window_bounds = array<i64: 1, 64>}, {pipeline_mode = #tpu.pipeline_mode<synchronous>, transform_indices = @transform_5, window_bounds = array<i64: 64, 16>}, {pipeline_mode = #tpu.pipeline_mode<synchronous>, transform_indices = @transform_6, window_bounds = array<i64: 1, 16>}, {transform_indices = @transform_7, window_bounds = array<i64: 8, 16>}]} {
    %c0 = arith.constant 0 : index
    %c0_0 = arith.constant 0 : index
    %0 = vector.load %arg1[%c0, %c0_0] : memref<8x64xf32, #tpu.memory_space<vmem>>, vector<8x64xf32>
    %c0_1 = arith.constant 0 : index
    %c0_2 = arith.constant 0 : index
    %1 = vector.load %arg2[%c0_1, %c0_2] : memref<64x64xf32, #tpu.memory_space<vmem>>, vector<64x64xf32>
    %cst = arith.constant dense<0.000000e+00> : vector<8x64xf32>
    %2 = tpu.matmul %0, %1, %cst {dimension_numbers = #tpu.dot_dimension_numbers<[1], [0], [0], [1], [0, 0, 1, 1], [], []>} : vector<8x64xf32>, vector<64x64xf32>, vector<8x64xf32> -> vector<8x64xf32>
    %c0_3 = arith.constant 0 : index
    %c0_4 = arith.constant 0 : index
    %3 = vector.load %arg3[%c0_3, %c0_4] : memref<1x64xf32, #tpu.memory_space<vmem>>, vector<1x64xf32>
    %4 = vector.broadcast %3 : vector<1x64xf32> to vector<8x64xf32>
    %5 = arith.addf %2, %4 : vector<8x64xf32>
    %cst_5 = arith.constant 0.000000e+00 : f32
    %6 = vector.broadcast %cst_5 : f32 to vector<8x64xf32>
    %7 = arith.maximumf %5, %6 : vector<8x64xf32>
    %c0_6 = arith.constant 0 : index
    %c0_7 = arith.constant 0 : index
    %8 = vector.load %arg4[%c0_6, %c0_7] : memref<64x64xf32, #tpu.memory_space<vmem>>, vector<64x64xf32>
    %cst_8 = arith.constant dense<0.000000e+00> : vector<8x64xf32>
    %9 = tpu.matmul %7, %8, %cst_8 {dimension_numbers = #tpu.dot_dimension_numbers<[1], [0], [0], [1], [0, 0, 1, 1], [], []>} : vector<8x64xf32>, vector<64x64xf32>, vector<8x64xf32> -> vector<8x64xf32>
    %c0_9 = arith.constant 0 : index
    %c0_10 = arith.constant 0 : index
    %10 = vector.load %arg5[%c0_9, %c0_10] : memref<1x64xf32, #tpu.memory_space<vmem>>, vector<1x64xf32>
    %11 = vector.broadcast %10 : vector<1x64xf32> to vector<8x64xf32>
    %12 = arith.addf %9, %11 : vector<8x64xf32>
    %cst_11 = arith.constant 0.000000e+00 : f32
    %13 = vector.broadcast %cst_11 : f32 to vector<8x64xf32>
    %14 = arith.maximumf %12, %13 : vector<8x64xf32>
    %c0_12 = arith.constant 0 : index
    %c0_13 = arith.constant 0 : index
    %15 = vector.load %arg6[%c0_12, %c0_13] : memref<64x16xf32, #tpu.memory_space<vmem>>, vector<64x16xf32>
    %cst_14 = arith.constant dense<0.000000e+00> : vector<8x16xf32>
    %16 = tpu.matmul %14, %15, %cst_14 {dimension_numbers = #tpu.dot_dimension_numbers<[1], [0], [0], [1], [0, 0, 1, 1], [], []>} : vector<8x64xf32>, vector<64x16xf32>, vector<8x16xf32> -> vector<8x16xf32>
    %c0_15 = arith.constant 0 : index
    %c0_16 = arith.constant 0 : index
    %17 = vector.load %arg7[%c0_15, %c0_16] : memref<1x16xf32, #tpu.memory_space<vmem>>, vector<1x16xf32>
    %18 = vector.broadcast %17 : vector<1x16xf32> to vector<8x16xf32>
    %19 = arith.addf %16, %18 : vector<8x16xf32>
    %c0_17 = arith.constant 0 : index
    %c0_18 = arith.constant 0 : index
    %20 = vector.load %arg8[%c0_17, %c0_18] : memref<8x16xf32, #tpu.memory_space<vmem>>, vector<8x16xf32>
    tpu.vector_store %arg8[%c0_17, %c0_18], %19 {strides = array<i32>} : memref<8x16xf32, #tpu.memory_space<vmem>>, vector<8x16xf32>,
    return
  }
  func.func @transform_0(%arg0: i32) -> (i32, i32) {
    %c0_i32 = arith.constant 0 : i32
    %c0_i32_0 = arith.constant 0 : i32
    return %arg0, %c0_i32 : i32, i32
  }
  func.func @transform_1(%arg0: i32) -> (i32, i32) {
    %c0_i32 = arith.constant 0 : i32
    %c0_i32_0 = arith.constant 0 : i32
    %c0_i32_1 = arith.constant 0 : i32
    return %c0_i32, %c0_i32_0 : i32, i32
  }
  func.func @transform_2(%arg0: i32) -> (i32, i32) {
    %c0_i32 = arith.constant 0 : i32
    %c0_i32_0 = arith.constant 0 : i32
    %c0_i32_1 = arith.constant 0 : i32
    return %c0_i32, %c0_i32_0 : i32, i32
  }
  func.func @transform_3(%arg0: i32) -> (i32, i32) {
    %c0_i32 = arith.constant 0 : i32
    %c0_i32_0 = arith.constant 0 : i32
    %c0_i32_1 = arith.constant 0 : i32
    return %c0_i32, %c0_i32_0 : i32, i32
  }
  func.func @transform_4(%arg0: i32) -> (i32, i32) {
    %c0_i32 = arith.constant 0 : i32
    %c0_i32_0 = arith.constant 0 : i32
    %c0_i32_1 = arith.constant 0 : i32
    return %c0_i32, %c0_i32_0 : i32, i32
  }
  func.func @transform_5(%arg0: i32) -> (i32, i32) {
    %c0_i32 = arith.constant 0 : i32
    %c0_i32_0 = arith.constant 0 : i32
    %c0_i32_1 = arith.constant 0 : i32
    return %c0_i32, %c0_i32_0 : i32, i32
  }
  func.func @transform_6(%arg0: i32) -> (i32, i32) {
    %c0_i32 = arith.constant 0 : i32
    %c0_i32_0 = arith.constant 0 : i32
    %c0_i32_1 = arith.constant 0 : i32
    return %c0_i32, %c0_i32_0 : i32, i32
  }
  func.func @transform_7(%arg0: i32) -> (i32, i32) {
    %c0_i32 = arith.constant 0 : i32
    %c0_i32_0 = arith.constant 0 : i32
    return %arg0, %c0_i32 : i32, i32
  }
}

</mosaic_0001>

<llo_original>
// kernel: tpu_custom_call.1
$region0: #{tpu_custom_call.1}
  #allocation0 [shape = 'u32[]', space=smem, size = 0x4, offset = 0x4, fixed_abs, tag = 'smem constant byte address 0x4 - core index']
  #allocation1 [shape = 'u32[72,128]{1,0:T(1,128)}', space=vmem, size = 0x9000, scoped, tag = 'internal scratch']
  %s0 = inlined_call_operand.vmem [shape: f32[8,64], index: 0, kind: input, shape index: {}]
  %s1 = inlined_call_operand.vmem [shape: f32[64,64], index: 1, kind: input, shape index: {}]
  %s2 = inlined_call_operand.vmem [shape: f32[1,64], index: 2, kind: input, shape index: {}]
  %s3 = inlined_call_operand.hbm [shape: f32[64,64], index: 3, kind: input, shape index: {}]
  %s4 = inlined_call_operand.vmem [shape: f32[1,64], index: 4, kind: input, shape index: {}]
  %s5 = inlined_call_operand.vmem [shape: f32[64,16], index: 5, kind: input, shape index: {}]
  %s6 = inlined_call_operand.vmem [shape: f32[1,16], index: 6, kind: input, shape index: {}]
  %s7 = inlined_call_operand.hbm [shape: f32[8,16], index: 7, kind: output, shape index: {}]
  %s8 = sld [smem:[#allocation0]]
  $region42: #{tpu_custom_call.1} parent=0
    _
  %s10 = ssub.s32 1, %s8
  %s11 = scalar_select 0, %s10, %s8
  $region1: #{tpu_custom_call.1} parent=0
    #allocation2 [shape = 'u8[32768]{0}', space=vmem, size = 0x8000, scoped, tag = 'input window, operand 3, single buffered']
    #allocation3 [shape = 's32[1]{0}', space=sflag, size = 0x4, scoped, tag = 'scoped memory for tpu_custom_call.1']
    #allocation4 [shape = 's32[1]{0}', space=sflag, size = 0x4, scoped, tag = 'scoped memory for tpu_custom_call.1']
    #allocation5 [shape = 'u8[4096]{0}', space=vmem, size = 0x1000, scoped, tag = 'output window, operand 0, single buffered']
    %12 = vsyncpa [#allocation3], 0
    %13 = vsyncpa [#allocation4], 0
    // Predicated region
    $region2: #{tpu_custom_call.1} parent=1 // pred_check
      _
    $region3: #{tpu_custom_call.1} parent=1 // pred_check_branch
      %15 = sbr.rel (0) target = $region5
    $region4: #{tpu_custom_call.1} parent=1 // pred_region
      _
    $region5: #{tpu_custom_call.1} parent=1 // pred_fallthru
      _
    // Predicated region
    $region6: #{tpu_custom_call.1} parent=1 // pred_check
      _
    $region7: #{tpu_custom_call.1} parent=1 // pred_check_branch
      %17 = sbr.rel (0) target = $region9
    $region8: #{tpu_custom_call.1} parent=1 // pred_region
      _
    $region9: #{tpu_custom_call.1} parent=1 // pred_fallthru
      _
    // Predicated region
    $region10: #{tpu_custom_call.1} parent=1 // pred_check
      _
    $region11: #{tpu_custom_call.1} parent=1 // pred_check_branch
      %19 = sbr.rel (0) target = $region13
    $region12: #{tpu_custom_call.1} parent=1 // pred_region
      _
    $region13: #{tpu_custom_call.1} parent=1 // pred_fallthru
      _
    // Predicated region
    $region14: #{tpu_custom_call.1} parent=1 // pred_check
      _
    $region15: #{tpu_custom_call.1} parent=1 // pred_check_branch
      %21 = sbr.rel (0) target = $region17
    $region16: #{tpu_custom_call.1} parent=1 // pred_region
      %23 = vsyncadd [#allocation3], 0
      %s24 = sshll.u32 %s3, 4
      %s25 = int_to_ptr.hbm [resolvable:$true] %s24
      %s26 = sshll.u32 [#allocation2], 4
      %s27 = int_to_ptr.vmem [resolvable:$true] %s26
      %32 = dma.hbm_to_vmem [thread:$0]  %s25, 1024, %s27, [#allocation3], 128, 128, 8
    $region17: #{tpu_custom_call.1} parent=1 // pred_fallthru
      _
    // Predicated region
    $region18: #{tpu_custom_call.1} parent=1 // pred_check
      _
    $region19: #{tpu_custom_call.1} parent=1 // pred_check_branch
      %34 = sbr.rel (0) target = $region21
    $region20: #{tpu_custom_call.1} parent=1 // pred_region
      _
    $region21: #{tpu_custom_call.1} parent=1 // pred_fallthru
      _
    // Predicated region
    $region22: #{tpu_custom_call.1} parent=1 // pred_check
      _
    $region23: #{tpu_custom_call.1} parent=1 // pred_check_branch
      %36 = sbr.rel (0) target = $region25
    $region24: #{tpu_custom_call.1} parent=1 // pred_region
      _
    $region25: #{tpu_custom_call.1} parent=1 // pred_fallthru
      _
    // Predicated region
    $region26: #{tpu_custom_call.1} parent=1 // pred_check
      _
    $region27: #{tpu_custom_call.1} parent=1 // pred_check_branch
      %38 = sbr.rel (0) target = $region29
    $region28: #{tpu_custom_call.1} parent=1 // pred_region
      _
    $region29: #{tpu_custom_call.1} parent=1 // pred_fallthru
      _
    // Predicated region
    $region30: #{tpu_custom_call.1} parent=1 // pred_check
      _
    $region31: #{tpu_custom_call.1} parent=1 // pred_check_branch
      %40 = sbr.rel (0) target = $region33
    $region32: #{tpu_custom_call.1} parent=1 // pred_region
      %42 = dma.done [#allocation3], 1024
    $region33: #{tpu_custom_call.1} parent=1 // pred_fallthru
      _
    %v43 = vld [vmem:[%s0] sm:$0xff]
    %v44 = vld [vmem:[%s1] sm:$0xff]
    %v45 = vld [vmem:[%s1 + $0x8] sm:$0xff]
    %v46 = vld [vmem:[%s1 + $0x10] sm:$0xff]
    %v47 = vld [vmem:[%s1 + $0x18] sm:$0xff]
    %v48 = vld [vmem:[%s1 + $0x20] sm:$0xff]
    %v49 = vld [vmem:[%s1 + $0x28] sm:$0xff]
    %v50 = vld [vmem:[%s1 + $0x30] sm:$0xff]
    %v51 = vld [vmem:[%s1 + $0x38] sm:$0xff]
    %v52 = vld [vmem:[%s2] sm:$0x1]
    %v54 = vperm.slane %v52, 0
    %vm56 = vcmask 523264
    %v58 = vsel %vm56, %v43, 0
    %60 = vmatpush.msra.mxu0 0.0
    %61 = vmatpush.msra.mxu0 0.0
    %62 = vmatpush.msra.mxu0 0.0
    %63 = vmatpush.msra.mxu0 0.0
    %64 = vmatpush.msra.mxu0 0.0
    %65 = vmatpush.msra.mxu0 0.0
    %66 = vmatpush.msra.mxu0 0.0
    %67 = vmatpush.msra.mxu0 0.0
    %68 = vmatpush.msra.mxu0 %v51
    %69 = vmatpush.msra.mxu0 %v50
    %70 = vmatpush.msra.mxu0 %v49
    %71 = vmatpush.msra.mxu0 %v48
    %72 = vmatpush.msra.mxu0 %v47
    %73 = vmatpush.msra.mxu0 %v46
    %74 = vmatpush.msra.mxu0 %v45
    %75 = vmatpush.msra.mxu0 %v44
    %76 = vmatmul.f32.gmra.mxu0 %v58
    %v77 = vpop.f32.mrf.mxu0
    %v78 = vadd.f32 %v54, %v77
    %79 = vdwg.mxu0
    %v80 = vmax.f32 %v78, 0.0
    %v81 = vld [vmem:[#allocation2] sm:$0xff]
    %v82 = vld [vmem:[#allocation2 + $0x8] sm:$0xff]
    %v83 = vld [vmem:[#allocation2 + $0x10] sm:$0xff]
    %v84 = vld [vmem:[#allocation2 + $0x18] sm:$0xff]
    %v85 = vld [vmem:[#allocation2 + $0x20] sm:$0xff]
    %v86 = vld [vmem:[#allocation2 + $0x28] sm:$0xff]
    %v87 = vld [vmem:[#allocation2 + $0x30] sm:$0xff]
    %v88 = vld [vmem:[#allocation2 + $0x38] sm:$0xff]
    %v89 = vld [vmem:[%s4] sm:$0x1]
    %v91 = vperm.slane %v89, 0
    %v94 = vsel %vm56, %v80, 0
    %96 = vmatpush.msra.mxu0 0.0
    %97 = vmatpush.msra.mxu0 0.0
    %98 = vmatpush.msra.mxu0 0.0
    %99 = vmatpush.msra.mxu0 0.0
    %100 = vmatpush.msra.mxu0 0.0
    %101 = vmatpush.msra.mxu0 0.0
    %102 = vmatpush.msra.mxu0 0.0
    %103 = vmatpush.msra.mxu0 0.0
    %104 = vmatpush.msra.mxu0 %v88
    %105 = vmatpush.msra.mxu0 %v87
    %106 = vmatpush.msra.mxu0 %v86
    %107 = vmatpush.msra.mxu0 %v85
    %108 = vmatpush.msra.mxu0 %v84
    %109 = vmatpush.msra.mxu0 %v83
    %110 = vmatpush.msra.mxu0 %v82
    %111 = vmatpush.msra.mxu0 %v81
    %112 = vmatmul.f32.gmra.mxu0 %v94
    %v113 = vpop.f32.mrf.mxu0
    %v114 = vadd.f32 %v91, %v113
    %115 = vdwg.mxu0
    %v116 = vmax.f32 %v114, 0.0
    %v117 = vld [vmem:[%s5] sm:$0xff]
    %v118 = vld [vmem:[%s5 + $0x8] sm:$0xff]
    %v119 = vld [vmem:[%s5 + $0x10] sm:$0xff]
    %v120 = vld [vmem:[%s5 + $0x18] sm:$0xff]
    %v121 = vld [vmem:[%s5 + $0x20] sm:$0xff]
    %v122 = vld [vmem:[%s5 + $0x28] sm:$0xff]
    %v123 = vld [vmem:[%s5 + $0x30] sm:$0xff]
    %v124 = vld [vmem:[%s5 + $0x38] sm:$0xff]
    %v125 = vld [vmem:[%s6] sm:$0x1]
    %v127 = vperm.slane %v125, 0
    %v130 = vsel %vm56, %v116, 0
    %132 = vmatpush.msra.mxu0 0.0
    %133 = vmatpush.msra.mxu0 0.0
    %134 = vmatpush.msra.mxu0 0.0
    %135 = vmatpush.msra.mxu0 0.0
    %136 = vmatpush.msra.mxu0 0.0
    %137 = vmatpush.msra.mxu0 0.0
    %138 = vmatpush.msra.mxu0 0.0
    %139 = vmatpush.msra.mxu0 0.0
    %140 = vmatpush.msra.mxu0 %v124
    %141 = vmatpush.msra.mxu0 %v123
    %142 = vmatpush.msra.mxu0 %v122
    %143 = vmatpush.msra.mxu0 %v121
    %144 = vmatpush.msra.mxu0 %v120
    %145 = vmatpush.msra.mxu0 %v119
    %146 = vmatpush.msra.mxu0 %v118
    %147 = vmatpush.msra.mxu0 %v117
    %148 = vmatmul.f32.gmra.mxu0 %v130
    %v149 = vpop.f32.mrf.mxu0
    %v150 = vadd.f32 %v127, %v149
    %151 = vdwg.mxu0
    %vm152 = vcmask 130048
    %153 = vst.msk [vmem:[#allocation5] sm:$0xff] %vm152, %v150
    // Predicated region
    $region34: #{tpu_custom_call.1} parent=1 // pred_check
      _
    $region35: #{tpu_custom_call.1} parent=1 // pred_check_branch
      %155 = sbr.rel (0) target = $region37
    $region36: #{tpu_custom_call.1} parent=1 // pred_region
      %157 = vsyncadd [#allocation4], 0
      %s159 = sshll.u32 [#allocation5], 4
      %s160 = int_to_ptr.vmem [resolvable:$true] %s159
      %s161 = sshll.u32 %s7, 4
      %s162 = int_to_ptr.hbm [resolvable:$true] %s161
      %164 = dma.vmem_to_hbm [thread:$0]  %s160, 128, %s162, [#allocation4]
    $region37: #{tpu_custom_call.1} parent=1 // pred_fallthru
      _
    // Predicated region
    $region38: #{tpu_custom_call.1} parent=1 // pred_check
      _
    $region39: #{tpu_custom_call.1} parent=1 // pred_check_branch
      %166 = sbr.rel (0) target = $region41
    $region40: #{tpu_custom_call.1} parent=1 // pred_region
      %168 = dma.done [#allocation4], 128
    $region41: #{tpu_custom_call.1} parent=1 // pred_fallthru
      _
    %169 = vsyncpa [#allocation3], 1
    %170 = vsyncpa [#allocation4], 1

</llo_original>
